<compile_context>
chip_gen: v5e
topology: v5e:2x2
jax: 0.10.0
libtpu: 0.0.40
codegen_flags: <defaults>
</compile_context>

<pallas_src>
import functools
import math

import jax
import jax.numpy as jnp
import numpy as np
from jax import lax
from jax.experimental import pallas as pl
from jax.experimental.pallas import tpu as pltpu

BN_EPS = 1e-5


# --------------------------------------------------------------------------
# Sizing helpers (generation-aware VMEM budget, tile picking).
# --------------------------------------------------------------------------
def _vmem_limit_bytes():
    """Generation-aware VMEM budget (v5e/v6e: 128 MiB physical, v7x: 64 MiB)."""
    try:
        cap = int(pltpu.get_tpu_info().vmem_capacity_bytes)
    except Exception:  # conservative fallback, safe on every generation
        cap = 64 * 1024 * 1024
    return max(32 * 1024 * 1024, min((cap * 3) // 4, 96 * 1024 * 1024))


def _pick_tile(total, cap, align):
    """Largest divisor of `total` that is a multiple of `align` and <= cap.

    Falls back to `total` (one full-extent block, always legal w.r.t. the
    lane/sublane constraint) if no aligned divisor exists; the VMEM limits are
    sized so this degenerate case still compiles.
    """
    cap = max(align, min(cap, total))
    start = (cap // align) * align
    for cand in range(start, 0, -align):
        if total % cand == 0:
            return cand
    return total


def _default_tile_n(n_rows, hidden, vmem_limit):
    weights = 2 * 2 * hidden * hidden * 2            # two bf16 weights, double-buffered
    budget = max(vmem_limit // 2 - weights, 1 << 20)
    per_row = 2 * 2 * hidden * (4 + 2)               # 2 views x 2 buffers x (f32 in + bf16 out)
    cap = min(max(8, budget // per_row), 2048)
    return _pick_tile(n_rows, cap=cap, align=8)


def _default_tile_k(dim, hidden, two_d, vmem_limit):
    align = hidden * 128 // math.gcd(hidden, 128)    # lcm(hidden, 128)
    budget = max(vmem_limit // 2 - two_d * two_d * 4, 1 << 20)
    cap = min(max(align, budget // (2 * two_d * 2)), 8192)   # double-buffered bf16 y tile
    return _pick_tile(dim, cap=cap, align=align)


# --------------------------------------------------------------------------
# Projection head, pass 1: BN1 batch statistics of y1 = h @ W1.T (both views).
#   grid = (N tiles,); stats accumulated in VMEM scratch, finalized on last tile.
#   Output stats1 layout: rows [mu_v1, mu_v2, var_v1, var_v2], shape (4, H).
# --------------------------------------------------------------------------
def _bn1_stats_kernel(h1_ref, h2_ref, w1t_ref, st1_ref, sum_ref, sq_ref, *, n_rows):
    n = pl.program_id(0)

    @pl.when(n == 0)
    def _():
        sum_ref[...] = jnp.zeros_like(sum_ref)
        sq_ref[...] = jnp.zeros_like(sq_ref)

    w1 = w1t_ref[...]                                        # (H, H) bf16, VMEM-resident
    for i, h_ref in enumerate((h1_ref, h2_ref)):
        y = jnp.dot(h_ref[...].astype(jnp.bfloat16), w1,
                    preferred_element_type=jnp.float32)      # (tile_n, H) f32
        sum_ref[i:i + 1, :] += jnp.sum(y, axis=0, keepdims=True)
        sq_ref[i:i + 1, :] += jnp.sum(y * y, axis=0, keepdims=True)

    @pl.when(n == pl.num_programs(0) - 1)
    def _():
        inv_n = jnp.float32(1.0 / n_rows)
        mu = sum_ref[...] * inv_n                            # (2, H)
        var = sq_ref[...] * inv_n - mu * mu
        st1_ref[0:2, :] = mu
        st1_ref[2:4, :] = var


# --------------------------------------------------------------------------
# Projection head, pass 2: y2 = relu(BN1(h @ W1.T)) @ W2.T  (both views).
#   Streams y2 (bf16) out per N tile and accumulates BN2 batch stats.
#   Output stats2 layout: rows [mu_v1, mu_v2, inv_sigma_v1, inv_sigma_v2].
# --------------------------------------------------------------------------
def _project_kernel(h1_ref, h2_ref, w1t_ref, g1_ref, b1_ref, w2t_ref, st1_ref,
                    y_ref, st2_ref, sum_ref, sq_ref, *, n_rows):
    n = pl.program_id(0)

    @pl.when(n == 0)
    def _():
        sum_ref[...] = jnp.zeros_like(sum_ref)
        sq_ref[...] = jnp.zeros_like(sq_ref)

    w1 = w1t_ref[...]
    w2 = w2t_ref[...]
    g1 = g1_ref[...]
    b1 = b1_ref[...]
    for i, h_ref in enumerate((h1_ref, h2_ref)):
        y1 = jnp.dot(h_ref[...].astype(jnp.bfloat16), w1,
                     preferred_element_type=jnp.float32)
        mu1 = st1_ref[i:i + 1, :]
        var1 = st1_ref[2 + i:3 + i, :]
        a = (y1 - mu1) * lax.rsqrt(var1 + BN_EPS) * g1 + b1
        a = jnp.maximum(a, 0.0)                              # ReLU
        y2 = jnp.dot(a.astype(jnp.bfloat16), w2,
                     preferred_element_type=jnp.float32)
        y_ref[i] = y2.astype(y_ref.dtype)                    # bf16 activation stream
        sum_ref[i:i + 1, :] += jnp.sum(y2, axis=0, keepdims=True)
        sq_ref[i:i + 1, :] += jnp.sum(y2 * y2, axis=0, keepdims=True)

    @pl.when(n == pl.num_programs(0) - 1)
    def _():
        inv_n = jnp.float32(1.0 / n_rows)
        mu2 = sum_ref[...] * inv_n
        var2 = sq_ref[...] * inv_n - mu2 * mu2
        st2_ref[0:2, :] = mu2
        st2_ref[2:4, :] = lax.rsqrt(var2 + BN_EPS)           # inv-sigma (BN2, affine=False)


def project_both(h1_2d, h2_2d, w1t_bf16, g1, b1, w2t_bf16, *, tile_n, vmem_limit):
    """Projection head on both views (no stacked-input copy; weights loaded once)."""
    n_rows, hd = h1_2d.shape
    assert n_rows % tile_n == 0, (n_rows, tile_n)
    grid = (n_rows // tile_n,)

    cparams = pltpu.CompilerParams(
        dimension_semantics=("arbitrary",),                  # N axis carries the stats reduction
        vmem_limit_bytes=vmem_limit)

    h_spec = pl.BlockSpec((tile_n, hd), lambda n: (n, 0))
    w_spec = pl.BlockSpec((hd, hd), lambda n: (0, 0))        # VMEM-resident weights
    v_spec = pl.BlockSpec((1, hd), lambda n: (0, 0))
    st_spec = pl.BlockSpec((4, hd), lambda n: (0, 0))

    stats1 = pl.pallas_call(
        functools.partial(_bn1_stats_kernel, n_rows=n_rows),
        out_shape=jax.ShapeDtypeStruct((4, hd), jnp.float32),
        grid=grid,
        in_specs=[h_spec, h_spec, w_spec],
        out_specs=st_spec,
        scratch_shapes=[pltpu.VMEM((2, hd), jnp.float32),
                        pltpu.VMEM((2, hd), jnp.float32)],
        compiler_params=cparams,
    )(h1_2d, h2_2d, w1t_bf16)

    y_pair, stats2 = pl.pallas_call(
        functools.partial(_project_kernel, n_rows=n_rows),
        out_shape=(jax.ShapeDtypeStruct((2, n_rows, hd), jnp.bfloat16),
                   jax.ShapeDtypeStruct((4, hd), jnp.float32)),
        grid=grid,
        in_specs=[h_spec, h_spec, w_spec, v_spec, v_spec, w_spec, st_spec],
        out_specs=(pl.BlockSpec((2, tile_n, hd), lambda n: (0, n, 0)), st_spec),
        scratch_shapes=[pltpu.VMEM((2, hd), jnp.float32),
                        pltpu.VMEM((2, hd), jnp.float32)],
        compiler_params=cparams,
    )(h1_2d, h2_2d, w1t_bf16, g1, b1, w2t_bf16, stats1)

    return y_pair, stats2


# --------------------------------------------------------------------------
# NT-Xent, stage 1: K-tiled stacked Gram accumulation with BN2 folded in.
#   grid = (n_split 'parallel', k_per 'arbitrary'); core c accumulates its
#   half of the K range into its own (2d, 2d) f32 output block.
# --------------------------------------------------------------------------
def _gram_kernel(y_ref, bn_ref, gram_ref, *, d):
    k = pl.program_id(1)

    @pl.when(k == 0)
    def _():
        gram_ref[...] = jnp.zeros_like(gram_ref)

    y = y_ref[...].astype(jnp.float32)                       # (2d, TK); HBM stream is bf16
    # BN2 (affine=False) folded here: explicit per row-half (view) mu / inv-sigma.
    z_top = (y[:d, :] - bn_ref[0:1, :]) * bn_ref[2:3, :]
    z_bot = (y[d:, :] - bn_ref[1:2, :]) * bn_ref[3:4, :]
    z = jnp.concatenate([z_top, z_bot], axis=0).astype(jnp.bfloat16)
    dn = (((1,), (1,)), ((), ()))                            # z @ z.T
    gram_ref[0] += lax.dot_general(z, z, dn, preferred_element_type=jnp.float32)


def _gram_accumulate(y_flat, bn_tiled, *, d, tile_k, n_split, vmem_limit):
    two_d, dim = y_flat.shape
    nk = dim // tile_k
    assert nk % n_split == 0, (nk, n_split)
    k_per = nk // n_split
    return pl.pallas_call(
        functools.partial(_gram_kernel, d=d),
        out_shape=jax.ShapeDtypeStruct((n_split, two_d, two_d), jnp.float32),
        grid=(n_split, k_per),
        in_specs=[
            pl.BlockSpec((two_d, tile_k), lambda c, k: (0, c * k_per + k)),
            pl.BlockSpec((4, tile_k), lambda c, k: (0, 0)),  # constant index: one DMA
        ],
        out_specs=pl.BlockSpec((1, two_d, two_d), lambda c, k: (c, 0, 0)),
        compiler_params=pltpu.CompilerParams(
            dimension_semantics=("parallel", "arbitrary"),
            vmem_limit_bytes=vmem_limit),
    )(y_flat, bn_tiled)


# --------------------------------------------------------------------------
# NT-Xent, stage 2 (tiny epilogue): combine partial Grams, scale by 1/T,
# mask the diagonal, logsumexp + positive extraction, mean -> scalar in SMEM.
# --------------------------------------------------------------------------
def _loss_kernel(gram_ref, loss_ref, *, d, n_split, inv_temp):
    two_d = 2 * d
    g = gram_ref[0]
    for c in range(1, n_split):
        g = g + gram_ref[c]
    logits = g * jnp.float32(inv_temp)                       # (2d, 2d)
    row = lax.broadcasted_iota(jnp.int32, (two_d, two_d), 0)
    col = lax.broadcasted_iota(jnp.int32, (two_d, two_d), 1)
    # positive for row r is Gram[r, (r + d) mod 2d]  (== the sim12 diagonal)
    tgt = jnp.where(row < d, row + d, row - d)
    pos = jnp.sum(jnp.where(col == tgt, logits, 0.0), axis=-1, keepdims=True)
    # masking the full diagonal == masking diag(sim11) and diag(sim22)
    masked = jnp.where(row == col, -jnp.inf, logits)
    m = jnp.max(masked, axis=-1, keepdims=True)
    lse = jnp.log(jnp.sum(jnp.exp(masked - m), axis=-1, keepdims=True)) + m
    loss_ref[0] = jnp.sum(lse - pos) / jnp.float32(two_d)


def _loss_from_gram(gram_parts, *, d, temperature, vmem_limit):
    n_split, two_d, _ = gram_parts.shape
    loss = pl.pallas_call(
        functools.partial(_loss_kernel, d=d, n_split=n_split,
                          inv_temp=1.0 / temperature),
        out_shape=jax.ShapeDtypeStruct((1,), jnp.float32),
        grid=(1,),
        in_specs=[pl.BlockSpec((n_split, two_d, two_d), lambda i: (0, 0, 0))],
        out_specs=pl.BlockSpec(memory_space=pltpu.SMEM),
        compiler_params=pltpu.CompilerParams(
            dimension_semantics=("arbitrary",),
            vmem_limit_bytes=vmem_limit),
    )(gram_parts)
    return loss[0]


# --------------------------------------------------------------------------
# Top-level wrapper replicating NTXENTloss.forward (calcsim='dot').
# --------------------------------------------------------------------------
def ntxent_loss(h1, h2, params, *, temperature=1.0, projectionhead=True,
                tile_n=None, tile_k=None):
    b, seq_len, hidden = h1.shape
    d = b
    dim = seq_len * hidden
    n_rows = b * seq_len
    w1t, bn1_gamma, bn1_beta, w2t = params

    vmem_limit = _vmem_limit_bytes()

    h1_2d = h1.reshape(n_rows, hidden)
    h2_2d = h2.reshape(n_rows, hidden)

    if projectionhead:
        if tile_n is None:
            tile_n = _default_tile_n(n_rows, hidden, vmem_limit)
        y_pair, stats2 = project_both(
            h1_2d, h2_2d,
            w1t.astype(jnp.bfloat16),
            bn1_gamma.astype(jnp.float32), bn1_beta.astype(jnp.float32),
            w2t.astype(jnp.bfloat16),
            tile_n=tile_n, vmem_limit=vmem_limit)
    else:
        # TODO(synk): this branch keeps a simple stacked copy; the no-copy path
        # above is only wired for the default projectionhead=True.
        y_pair = jnp.stack([h1_2d, h2_2d], axis=0).astype(jnp.bfloat16)
        stats2 = jnp.concatenate([jnp.zeros((2, hidden), jnp.float32),
                                  jnp.ones((2, hidden), jnp.float32)], axis=0)

    # (2, b*seq, H) -> (2b, seq*H): contiguous row-major reshape, no data movement.
    y_flat = y_pair.reshape(2 * d, dim)

    two_d = 2 * d
    if tile_k is None:
        tile_k = _default_tile_k(dim, hidden, two_d, vmem_limit)
    assert dim % tile_k == 0 and tile_k % hidden == 0, (dim, tile_k, hidden)
    assert tile_k % 128 == 0 or tile_k == dim, tile_k

    # BN2 (mu, inv-sigma) replicated once to a single K tile (flat column j uses
    # BN column j % hidden); constant index_map => DMA'd into VMEM exactly once.
    bn_tiled = jnp.tile(stats2, (1, tile_k // hidden))       # (4, tile_k)

    nk = dim // tile_k
    n_split = 2 if nk % 2 == 0 else 1                        # feeds both v7x TensorCores
    gram_parts = _gram_accumulate(y_flat, bn_tiled, d=d, tile_k=tile_k,
                                  n_split=n_split, vmem_limit=vmem_limit)
    return _loss_from_gram(gram_parts, d=d, temperature=temperature,
                           vmem_limit=vmem_limit)


# --------------------------------------------------------------------------
# Numpy reference replicating the PyTorch forward ('dot' path), with the same
# bf16 rounding points as the Pallas kernels (MXU operands + stored y / z).
# --------------------------------------------------------------------------
def reference_loss(h1, h2, W1, g1, b1, W2, temperature):
    b, seq_len, hidden = h1.shape

    def bf16(x):
        return np.asarray(x).astype(jnp.bfloat16).astype(np.float32)

    w1t = bf16(W1.T)
    w2t = bf16(W2.T)

    def proj(h):
        y1 = bf16(h) @ w1t                                    # f32 accumulation
        mu1 = y1.mean(0)
        var1 = (y1 * y1).mean(0) - mu1 * mu1
        a = (y1 - mu1) / np.sqrt(var1 + BN_EPS) * g1 + b1
        a = np.maximum(a, 0.0)
        y2 = bf16(a) @ w2t
        mu2 = y2.mean(0)
        var2 = (y2 * y2).mean(0) - mu2 * mu2
        z = (bf16(y2) - mu2) / np.sqrt(var2 + BN_EPS)         # stats from f32 y2, values bf16
        return bf16(z)

    z1 = proj(h1.reshape(b * seq_len, hidden)).reshape(b, seq_len * hidden)
    z2 = proj(h2.reshape(b * seq_len, hidden)).reshape(b, seq_len * hidden)

    sim11 = z1 @ z1.T / temperature
    sim22 = z2 @ z2.T / temperature
    sim12 = z1 @ z2.T / temperature
    d = sim12.shape[-1]
    np.fill_diagonal(sim11, -np.inf)
    np.fill_diagonal(sim22, -np.inf)
    raw = np.concatenate(
        [np.concatenate([sim12, sim11], axis=-1),
         np.concatenate([sim22, sim12.T], axis=-1)], axis=0)
    m = raw.max(axis=-1, keepdims=True)
    lse = np.log(np.exp(raw - m).sum(axis=-1)) + m[:, 0]
    return float((lse - raw[np.arange(2 * d), np.arange(2 * d)]).mean())


if __name__ == "__main__":
    # Small shapes consistent with the module: batch=8, bert_max_len=16,
    # bert_hidden_units=32, projectionhead=True, temperature=1.0.
    b, seq_len, hidden = 8, 16, 32
    temperature = 1.0

    key = jax.random.PRNGKey(0)
    k1, k2, k3, k4, k5, k6 = jax.random.split(key, 6)
    h1 = jax.random.normal(k1, (b, seq_len, hidden), dtype=jnp.float32)
    h2 = jax.random.normal(k2, (b, seq_len, hidden), dtype=jnp.float32)

    # Parameter shapes from __init__: two bias-free (H, H) Linear weights and
    # BatchNorm1d affine params (perturbed from default 1/0 so the affine path
    # is actually exercised).
    W1 = jax.random.normal(k3, (hidden, hidden), dtype=jnp.float32) / jnp.sqrt(hidden)
    W2 = jax.random.normal(k4, (hidden, hidden), dtype=jnp.float32) / jnp.sqrt(hidden)
    g1 = 1.0 + 0.1 * jax.random.normal(k5, (1, hidden), dtype=jnp.float32)
    b1 = 0.1 * jax.random.normal(k6, (1, hidden), dtype=jnp.float32)
    params = (W1.T, g1, b1, W2.T)

    # Small explicit tiles so the multi-step N tiling, the 2-way K split and the
    # multi-step K accumulation paths (pl.when init / accumulate / finalize) are
    # all exercised at this toy size.
    loss = ntxent_loss(h1, h2, params, temperature=temperature,
                       projectionhead=True, tile_n=32, tile_k=128)
    loss = jax.block_until_ready(loss)

    ref = reference_loss(np.asarray(h1), np.asarray(h2), np.asarray(W1),
                         np.asarray(g1)[0], np.asarray(b1)[0], np.asarray(W2),
                         temperature)
    assert np.allclose(float(loss), ref, rtol=5e-3, atol=1e-2), (float(loss), ref)
    print("KERNEL_OK")
</pallas_src>

<mosaic_0001>
module attributes {stable_mosaic.version = 11 : i64} {
  func.func @_bn1_stats_kernel(%arg0: i32, %arg1: memref<32x32xf32, #tpu.memory_space<vmem>>, %arg2: memref<32x32xf32, #tpu.memory_space<vmem>>, %arg3: memref<32x32xbf16, #tpu.memory_space<vmem>>, %arg4: memref<4x32xf32, #tpu.memory_space<vmem>>, %arg5: memref<2x32xf32, #tpu.memory_space<vmem>>, %arg6: memref<2x32xf32, #tpu.memory_space<vmem>>) attributes {dimension_semantics = [#tpu.dimension_semantics<arbitrary>], iteration_bounds = array<i64: 4>, scalar_prefetch = 0 : i64, scratch_operands = 2 : i64, tpu.core_type = #tpu.core_type<tc>, window_params = [{transform_indices = @transform_0, window_bounds = array<i64: 32, 32>}, {transform_indices = @transform_1, window_bounds = array<i64: 32, 32>}, {pipeline_mode = #tpu.pipeline_mode<synchronous>, transform_indices = @transform_2, window_bounds = array<i64: 32, 32>}, {pipeline_mode = #tpu.pipeline_mode<synchronous>, transform_indices = @transform_3, window_bounds = array<i64: 4, 32>}]} {
    %c0_i32 = arith.constant 0 : i32
    %0 = arith.cmpi eq, %arg0, %c0_i32 : i32
    %1 = arith.extui %0 : i1 to i32
    %c0_i32_0 = arith.constant 0 : i32
    %2 = arith.cmpi ne, %1, %c0_i32_0 : i32
    scf.if %2 {
      %cst_27 = arith.constant 0.000000e+00 : f32
      %35 = vector.broadcast %cst_27 : f32 to vector<2x32xf32>
      %c0_28 = arith.constant 0 : index
      %c0_29 = arith.constant 0 : index
      %36 = vector.load %arg5[%c0_28, %c0_29] : memref<2x32xf32, #tpu.memory_space<vmem>>, vector<2x32xf32>
      tpu.vector_store %arg5[%c0_28, %c0_29], %35 {strides = array<i32>} : memref<2x32xf32, #tpu.memory_space<vmem>>, vector<2x32xf32>,
      %cst_30 = arith.constant 0.000000e+00 : f32
      %37 = vector.broadcast %cst_30 : f32 to vector<2x32xf32>
      %c0_31 = arith.constant 0 : index
      %c0_32 = arith.constant 0 : index
      %38 = vector.load %arg6[%c0_31, %c0_32] : memref<2x32xf32, #tpu.memory_space<vmem>>, vector<2x32xf32>
      tpu.vector_store %arg6[%c0_31, %c0_32], %37 {strides = array<i32>} : memref<2x32xf32, #tpu.memory_space<vmem>>, vector<2x32xf32>,
    } else {
    }
    %c0 = arith.constant 0 : index
    %c0_1 = arith.constant 0 : index
    %3 = vector.load %arg3[%c0, %c0_1] : memref<32x32xbf16, #tpu.memory_space<vmem>>, vector<32x32xbf16>
    %c0_2 = arith.constant 0 : index
    %c0_3 = arith.constant 0 : index
    %4 = vector.load %arg1[%c0_2, %c0_3] : memref<32x32xf32, #tpu.memory_space<vmem>>, vector<32x32xf32>
    %5 = arith.truncf %4 : vector<32x32xf32> to vector<32x32xbf16>
    %cst = arith.constant dense<0.000000e+00> : vector<32x32xf32>
    %6 = tpu.matmul %5, %3, %cst {dimension_numbers = #tpu.dot_dimension_numbers<[1], [0], [0], [1], [0, 0, 1, 1], [], []>} : vector<32x32xbf16>, vector<32x32xbf16>, vector<32x32xf32> -> vector<32x32xf32>
    %c0_4 = arith.constant 0 : index
    %c0_5 = arith.constant 0 : index
    %7 = vector.load %arg5[%c0_4, %c0_5] : memref<2x32xf32, #tpu.memory_space<vmem>>, vector<1x32xf32>
    %cst_6 = arith.constant dense<0.000000e+00> : vector<32xf32>
    %8 = vector.multi_reduction <add>, %6, %cst_6 [0] : vector<32x32xf32> to vector<32xf32>
    %9 = vector.shape_cast %8 : vector<32xf32> to vector<1x32xf32>
    %10 = arith.addf %7, %9 : vector<1x32xf32>
    %c0_7 = arith.constant 0 : index
    %c0_8 = arith.constant 0 : index
    %11 = vector.load %arg5[%c0_7, %c0_8] : memref<2x32xf32, #tpu.memory_space<vmem>>, vector<1x32xf32>
    tpu.vector_store %arg5[%c0_7, %c0_8], %10 {strides = array<i32>} : memref<2x32xf32, #tpu.memory_space<vmem>>, vector<1x32xf32>,
    %c0_9 = arith.constant 0 : index
    %c0_10 = arith.constant 0 : index
    %12 = vector.load %arg6[%c0_9, %c0_10] : memref<2x32xf32, #tpu.memory_space<vmem>>, vector<1x32xf32>
    %13 = arith.mulf %6, %6 : vector<32x32xf32>
    %cst_11 = arith.constant dense<0.000000e+00> : vector<32xf32>
    %14 = vector.multi_reduction <add>, %13, %cst_11 [0] : vector<32x32xf32> to vector<32xf32>
    %15 = vector.shape_cast %14 : vector<32xf32> to vector<1x32xf32>
    %16 = arith.addf %12, %15 : vector<1x32xf32>
    %c0_12 = arith.constant 0 : index
    %c0_13 = arith.constant 0 : index
    %17 = vector.load %arg6[%c0_12, %c0_13] : memref<2x32xf32, #tpu.memory_space<vmem>>, vector<1x32xf32>
    tpu.vector_store %arg6[%c0_12, %c0_13], %16 {strides = array<i32>} : memref<2x32xf32, #tpu.memory_space<vmem>>, vector<1x32xf32>,
    %c0_14 = arith.constant 0 : index
    %c0_15 = arith.constant 0 : index
    %18 = vector.load %arg2[%c0_14, %c0_15] : memref<32x32xf32, #tpu.memory_space<vmem>>, vector<32x32xf32>
    %19 = arith.truncf %18 : vector<32x32xf32> to vector<32x32xbf16>
    %cst_16 = arith.constant dense<0.000000e+00> : vector<32x32xf32>
    %20 = tpu.matmul %19, %3, %cst_16 {dimension_numbers = #tpu.dot_dimension_numbers<[1], [0], [0], [1], [0, 0, 1, 1], [], []>} : vector<32x32xbf16>, vector<32x32xbf16>, vector<32x32xf32> -> vector<32x32xf32>
    %c1 = arith.constant 1 : index
    %c0_17 = arith.constant 0 : index
    %21 = vector.load %arg5[%c1, %c0_17] : memref<2x32xf32, #tpu.memory_space<vmem>>, vector<1x32xf32>
    %cst_18 = arith.constant dense<0.000000e+00> : vector<32xf32>
    %22 = vector.multi_reduction <add>, %20, %cst_18 [0] : vector<32x32xf32> to vector<32xf32>
    %23 = vector.shape_cast %22 : vector<32xf32> to vector<1x32xf32>
    %24 = arith.addf %21, %23 : vector<1x32xf32>
    %c1_19 = arith.constant 1 : index
    %c0_20 = arith.constant 0 : index
    %25 = vector.load %arg5[%c1_19, %c0_20] : memref<2x32xf32, #tpu.memory_space<vmem>>, vector<1x32xf32>
    tpu.vector_store %arg5[%c1_19, %c0_20], %24 {strides = array<i32>} : memref<2x32xf32, #tpu.memory_space<vmem>>, vector<1x32xf32>,
    %c1_21 = arith.constant 1 : index
    %c0_22 = arith.constant 0 : index
    %26 = vector.load %arg6[%c1_21, %c0_22] : memref<2x32xf32, #tpu.memory_space<vmem>>, vector<1x32xf32>
    %27 = arith.mulf %20, %20 : vector<32x32xf32>
    %cst_23 = arith.constant dense<0.000000e+00> : vector<32xf32>
    %28 = vector.multi_reduction <add>, %27, %cst_23 [0] : vector<32x32xf32> to vector<32xf32>
    %29 = vector.shape_cast %28 : vector<32xf32> to vector<1x32xf32>
    %30 = arith.addf %26, %29 : vector<1x32xf32>
    %c1_24 = arith.constant 1 : index
    %c0_25 = arith.constant 0 : index
    %31 = vector.load %arg6[%c1_24, %c0_25] : memref<2x32xf32, #tpu.memory_space<vmem>>, vector<1x32xf32>
    tpu.vector_store %arg6[%c1_24, %c0_25], %30 {strides = array<i32>} : memref<2x32xf32, #tpu.memory_space<vmem>>, vector<1x32xf32>,
    %c3_i32 = arith.constant 3 : i32
    %32 = arith.cmpi eq, %arg0, %c3_i32 : i32
    %33 = arith.extui %32 : i1 to i32
    %c0_i32_26 = arith.constant 0 : i32
    %34 = arith.cmpi ne, %33, %c0_i32_26 : i32
    scf.if %34 {
      %c0_27 = arith.constant 0 : index
      %c0_28 = arith.constant 0 : index
      %35 = vector.load %arg5[%c0_27, %c0_28] : memref<2x32xf32, #tpu.memory_space<vmem>>, vector<2x32xf32>
      %cst_29 = arith.constant 7.812500e-03 : f32
      %36 = vector.broadcast %cst_29 : f32 to vector<2x32xf32>
      %37 = arith.mulf %35, %36 : vector<2x32xf32>
      %c0_30 = arith.constant 0 : index
      %c0_31 = arith.constant 0 : index
      %38 = vector.load %arg6[%c0_30, %c0_31] : memref<2x32xf32, #tpu.memory_space<vmem>>, vector<2x32xf32>
      %cst_32 = arith.constant 7.812500e-03 : f32
      %39 = vector.broadcast %cst_32 : f32 to vector<2x32xf32>
      %40 = arith.mulf %38, %39 : vector<2x32xf32>
      %41 = arith.mulf %37, %37 : vector<2x32xf32>
      %42 = arith.subf %40, %41 : vector<2x32xf32>
      %c0_33 = arith.constant 0 : index
      %c0_34 = arith.constant 0 : index
      %43 = vector.load %arg4[%c0_33, %c0_34] : memref<4x32xf32, #tpu.memory_space<vmem>>, vector<2x32xf32>
      tpu.vector_store %arg4[%c0_33, %c0_34], %37 {strides = array<i32>} : memref<4x32xf32, #tpu.memory_space<vmem>>, vector<2x32xf32>,
      %c2 = arith.constant 2 : index
      %c0_35 = arith.constant 0 : index
      %44 = vector.load %arg4[%c2, %c0_35] : memref<4x32xf32, #tpu.memory_space<vmem>>, vector<2x32xf32>
      tpu.vector_store %arg4[%c2, %c0_35], %42 {strides = array<i32>} : memref<4x32xf32, #tpu.memory_space<vmem>>, vector<2x32xf32>,
    } else {
    }
    return
  }
  func.func @transform_0(%arg0: i32) -> (i32, i32) {
    %c0_i32 = arith.constant 0 : i32
    %c0_i32_0 = arith.constant 0 : i32
    return %arg0, %c0_i32 : i32, i32
  }
  func.func @transform_1(%arg0: i32) -> (i32, i32) {
    %c0_i32 = arith.constant 0 : i32
    %c0_i32_0 = arith.constant 0 : i32
    return %arg0, %c0_i32 : i32, i32
  }
  func.func @transform_2(%arg0: i32) -> (i32, i32) {
    %c0_i32 = arith.constant 0 : i32
    %c0_i32_0 = arith.constant 0 : i32
    %c0_i32_1 = arith.constant 0 : i32
    return %c0_i32, %c0_i32_0 : i32, i32
  }
  func.func @transform_3(%arg0: i32) -> (i32, i32) {
    %c0_i32 = arith.constant 0 : i32
    %c0_i32_0 = arith.constant 0 : i32
    %c0_i32_1 = arith.constant 0 : i32
    return %c0_i32, %c0_i32_0 : i32, i32
  }
}

</mosaic_0001>

<llo_original>
// kernel: tpu_custom_call.1
$region0: #{tpu_custom_call.1}
  #allocation0 [shape = 'u32[]', space=smem, size = 0x4, offset = 0x4, fixed_abs, tag = 'smem constant byte address 0x4 - core index']
  #allocation1 [shape = 'u32[72,128]{1,0:T(1,128)}', space=vmem, size = 0x9000, scoped, tag = 'internal scratch']
  #allocation2 [shape = 'f32[2,32]{1,0:T(2,128)}', space=vmem, size = 0x400, scoped, tag = 'scratch operand']
  #allocation3 [shape = 'f32[2,32]{1,0:T(2,128)}', space=vmem, size = 0x400, scoped, tag = 'scratch operand']
  %s0 = inlined_call_operand.vmem [shape: f32[128,32], index: 0, kind: input, shape index: {}]
  %s1 = inlined_call_operand.vmem [shape: f32[128,32], index: 1, kind: input, shape index: {}]
  %s2 = inlined_call_operand.vmem [shape: bf16[32,32], index: 2, kind: input, shape index: {}]
  %s3 = inlined_call_operand.hbm [shape: f32[4,32], index: 3, kind: output, shape index: {}]
  %s4 = sld [smem:[#allocation0]]
  $region53: #{tpu_custom_call.1} parent=0
    _
  %s6 = ssub.s32 1, %s4
  %s7 = scalar_select 0, %s6, %s4
  $region1: #{tpu_custom_call.1} parent=0
    #allocation4 [shape = 'u8[2048]{0}', space=vmem, size = 0x800, scoped, tag = 'output window, operand 0, single buffered']
    #allocation5 [shape = 's32[2]{0}', space=sflag, size = 0x8, scoped, tag = 'scoped memory for tpu_custom_call.1']
    %8 = vsyncpa [#allocation5], 0
    loop: start=0, step=1, limit=6
    $region2: #{tpu_custom_call.1} parent=1 // loop_pre_header
      _
    $region3: #{tpu_custom_call.1} parent=1 // loop_header
      %s10 = sphi 0, %s14
      %p11 = scmp.ge.s32.totalorder %s10, 6
      %s20 = sphi 0, %s22
      %s23 = sphi 0, %s20
      %s24 = sphi 0, %s23
      %s40 = sphi 0, %s24
      %s46 = sphi 0, %s48
      %s49 = sphi 0, %s46
      %s50 = sphi 0, %s49
      %s66 = sphi 0, %s50
      %s70 = sphi 0, %s70
      %s72 = sphi 0, %s70
      %s73 = sphi 0, %s72
      %s87 = sphi 0, %s73
      %s91 = sphi 0, %s91
      %s93 = sphi 0, %s91
      %s94 = sphi 0, %s93
      %s108 = sphi 0, %s94
    $region4: #{tpu_custom_call.1} parent=1 // loop_header_branch
      %13 = sbr.rel (%p11) target = $region8
    $region5: #{tpu_custom_call.1} parent=1 // loop_body
      %s15 = ssub.s32 %s10, 1
      %s16 = ssub.s32 %s10, 2
      %s17 = sadd.s32 %s10, 1
      %s18 = ssub.s32 %s10, %s17
      %p19 = scmp.eq.s32.totalorder %s18, 0
      %s21 = sadd.s32 %s20, 1
      %s22 = scalar_select %p19, %s20, %s21
      %p25 = pneg %p19
      %p26 = scmp.eq.s32.totalorder %s10, 3
      %p27 = por %p25, %p26
      %p28 = scmp.ne.s32.totalorder %s20, %s23
      %p29 = scmp.eq.s32.totalorder %s10, 0
      %p30 = por %p28, %p29
      %p31 = scmp.ne.s32.totalorder %s20, %s23
      %p32 = scmp.eq.s32.totalorder %s15, 3
      %p33 = por %p31, %p32
      %p34 = scmp.ne.s32.totalorder %s23, %s24
      %p35 = scmp.eq.s32.totalorder %s15, 0
      %p36 = por %p34, %p35
      %p37 = scmp.ne.s32.totalorder %s23, %s24
      %p38 = scmp.eq.s32.totalorder %s16, 3
      %p39 = por %p37, %p38
      %p41 = scmp.ne.s32.totalorder %s24, %s40
      %p42 = scmp.eq.s32.totalorder %s16, 0
      %p43 = por %p41, %p42
      %s44 = ssub.s32 %s10, %s17
      %p45 = scmp.eq.s32.totalorder %s44, 0
      %s47 = sadd.s32 %s46, 1
      %s48 = scalar_select %p45, %s46, %s47
      %p51 = pneg %p45
      %p52 = scmp.eq.s32.totalorder %s10, 3
      %p53 = por %p51, %p52
      %p54 = scmp.ne.s32.totalorder %s46, %s49
      %p55 = scmp.eq.s32.totalorder %s10, 0
      %p56 = por %p54, %p55
      %p57 = scmp.ne.s32.totalorder %s46, %s49
      %p58 = scmp.eq.s32.totalorder %s15, 3
      %p59 = por %p57, %p58
      %p60 = scmp.ne.s32.totalorder %s49, %s50
      %p61 = scmp.eq.s32.totalorder %s15, 0
      %p62 = por %p60, %p61
      %p63 = scmp.ne.s32.totalorder %s49, %s50
      %p64 = scmp.eq.s32.totalorder %s16, 3
      %p65 = por %p63, %p64
      %p67 = scmp.ne.s32.totalorder %s50, %s66
      %p68 = scmp.eq.s32.totalorder %s16, 0
      %p69 = por %p67, %p68
      %s71 = sadd.s32 %s70, 1
      %p74 = scmp.eq.s32.totalorder %s10, 3
      %p75 = scmp.ne.s32.totalorder %s70, %s72
      %p76 = scmp.eq.s32.totalorder %s10, 0
      %p77 = por %p75, %p76
      %p78 = scmp.ne.s32.totalorder %s70, %s72
      %p79 = scmp.eq.s32.totalorder %s15, 3
      %p80 = por %p78, %p79
      %p81 = scmp.ne.s32.totalorder %s72, %s73
      %p82 = scmp.eq.s32.totalorder %s15, 0
      %p83 = por %p81, %p82
      %p84 = scmp.ne.s32.totalorder %s72, %s73
      %p85 = scmp.eq.s32.totalorder %s16, 3
      %p86 = por %p84, %p85
      %p88 = scmp.ne.s32.totalorder %s73, %s87
      %p89 = scmp.eq.s32.totalorder %s16, 0
      %p90 = por %p88, %p89
      %s92 = sadd.s32 %s91, 1
      %p95 = scmp.eq.s32.totalorder %s10, 3
      %p96 = scmp.ne.s32.totalorder %s91, %s93
      %p97 = scmp.eq.s32.totalorder %s10, 0
      %p98 = por %p96, %p97
      %p99 = scmp.ne.s32.totalorder %s91, %s93
      %p100 = scmp.eq.s32.totalorder %s15, 3
      %p101 = por %p99, %p100
      %p102 = scmp.ne.s32.totalorder %s93, %s94
      %p103 = scmp.eq.s32.totalorder %s15, 0
      %p104 = por %p102, %p103
      %p105 = scmp.ne.s32.totalorder %s93, %s94
      %p106 = scmp.eq.s32.totalorder %s16, 3
      %p107 = por %p105, %p106
      %p109 = scmp.ne.s32.totalorder %s94, %s108
      %p110 = scmp.eq.s32.totalorder %s16, 0
      %p111 = por %p109, %p110
      %p112 = scmp.le.s32.totalorder 1, %s10
      %p113 = scmp.lt.s32.totalorder %s10, 5
      %p114 = pnand %p112, %p113
      %p115 = pneg %p114
      // Predicated region
      $region9: #{tpu_custom_call.1} parent=5 // pred_check
        _
      $region10: #{tpu_custom_call.1} parent=5 // pred_check_branch
        %117 = sbr.rel (%p114) target = $region12
      $region11: #{tpu_custom_call.1} parent=5 // pred_region
        %s118 = ssub.s32 %s10, 1
        // Predicated region
        $region13: #{tpu_custom_call.1} parent=11 // pred_check
          %p119 = pneg %p83
        $region14: #{tpu_custom_call.1} parent=11 // pred_check_branch
          %121 = sbr.rel (%p119) target = $region16
        $region15: #{tpu_custom_call.1} parent=11 // pred_region
          _
        $region16: #{tpu_custom_call.1} parent=11 // pred_fallthru
          _
      $region12: #{tpu_custom_call.1} parent=5 // pred_fallthru
        _
      %p122 = scmp.lt.s32.totalorder %s10, 4
      // Predicated region
      $region17: #{tpu_custom_call.1} parent=5 // pred_check
        %p123 = pneg %p122
      $region18: #{tpu_custom_call.1} parent=5 // pred_check_branch
        %125 = sbr.rel (%p123) target = $region20
      $region19: #{tpu_custom_call.1} parent=5 // pred_region
        // Predicated region
        $region21: #{tpu_custom_call.1} parent=19 // pred_check
          %p126 = pneg %p30
        $region22: #{tpu_custom_call.1} parent=19 // pred_check_branch
          %128 = sbr.rel (%p126) target = $region24
        $region23: #{tpu_custom_call.1} parent=19 // pred_region
          %s129 = smul.u32 4, %s10
          %p130 = scmp.lt.s32.totalorder %s129, 15
          %s131 = scalar_select %p130, %s129, 15
          %s132 = smul.addr %s131, 8
          %s133 = scalar_lea.vmem %s0, %s132
          %s134 = smul.u32 4, %s10
        $region24: #{tpu_custom_call.1} parent=19 // pred_fallthru
          _
        // Predicated region
        $region25: #{tpu_custom_call.1} parent=19 // pred_check
          %p135 = pneg %p56
        $region26: #{tpu_custom_call.1} parent=19 // pred_check_branch
          %137 = sbr.rel (%p135) target = $region28
        $region27: #{tpu_custom_call.1} parent=19 // pred_region
          %s138 = smul.u32 4, %s10
          %p139 = scmp.lt.s32.totalorder %s138, 15
          %s140 = scalar_select %p139, %s138, 15
          %s141 = smul.addr %s140, 8
          %s142 = scalar_lea.vmem %s1, %s141
          %s143 = smul.u32 4, %s10
        $region28: #{tpu_custom_call.1} parent=19 // pred_fallthru
          _
      $region20: #{tpu_custom_call.1} parent=5 // pred_fallthru
        _
      %p144 = scmp.le.s32.totalorder 1, %s10
      %p145 = scmp.lt.s32.totalorder %s10, 5
      %p146 = pnand %p144, %p145
      %p147 = pneg %p146
      // Predicated region
      $region29: #{tpu_custom_call.1} parent=5 // pred_check
        _
      $region30: #{tpu_custom_call.1} parent=5 // pred_check_branch
        %149 = sbr.rel (%p146) target = $region32
      $region31: #{tpu_custom_call.1} parent=5 // pred_region
        %s150 = ssub.s32 %s10, 1
        %s151 = smul.u32 4, %s15
        %p152 = scmp.lt.s32.totalorder %s151, 15
        %s153 = scalar_select %p152, %s151, 15
        %s154 = smul.addr %s153, 8
        %s155 = scalar_lea.vmem %s0, %s154
        %p156 = pneg %p36
        %p157 = pneg %p33
        %s158 = smul.u32 4, %s15
        %p159 = scmp.lt.s32.totalorder %s158, 15
        %s160 = scalar_select %p159, %s158, 15
        %s161 = smul.addr %s160, 8
        %s162 = scalar_lea.vmem %s1, %s161
        %p163 = pneg %p62
        %p164 = pneg %p59
        %p165 = pneg %p83
        %p166 = pneg %p80
        %p167 = pneg %p104
        %p168 = pneg %p101
        %s169 = smul.u32 4, %s15
        %p170 = scmp.lt.s32.totalorder %s169, 15
        %s171 = scalar_select %p170, %s169, 15
        %s172 = smul.addr %s171, 8
        %s173 = scalar_lea.vmem %s0, %s172
        %s174 = smul.u32 4, %s15
        %s175 = smul.u32 4, %s15
        %p176 = scmp.lt.s32.totalorder %s175, 15
        %s177 = scalar_select %p176, %s175, 15
        %s178 = smul.addr %s177, 8
        %s179 = scalar_lea.vmem %s1, %s178
        %s180 = smul.u32 4, %s15
        %p182 = scmp.eq.s32.totalorder %s15, 0
        // Predicated region
        $region33: #{tpu_custom_call.1} parent=31 // pred_check
          %p183 = pneg %p182
        $region34: #{tpu_custom_call.1} parent=31 // pred_check_branch
          %185 = sbr.rel (%p183) target = $region36
        $region35: #{tpu_custom_call.1} parent=31 // pred_region
          %vm186 = vcmask 254976
          %187 = vst.msk [vmem:[#allocation2] sm:$0x3] %vm186, 0.0
          %188 = vst.msk [vmem:[#allocation3] sm:$0x3] %vm186, 0.0
        $region36: #{tpu_custom_call.1} parent=31 // pred_fallthru
          _
        %v189 = vld [vmem:[%s2] sm:$0xf]
        %v190 = vld [vmem:[%s2 + $0x4] sm:$0xf]
        %v191 = vld [vmem:[%s2 + $0x8] sm:$0xf]
        %v192 = vld [vmem:[%s2 + $0xc] sm:$0xf]
        %v193 = vld [vmem:[%s173] sm:$0xff]
        %v194 = vld [vmem:[%s173 + $0x8] sm:$0xff]
        %v195 = vld [vmem:[%s173 + $0x10] sm:$0xff]
        %v196 = vld [vmem:[%s173 + $0x18] sm:$0xff]
        %v197 = vpack.c.bf16 %v194, %v193
        %v198 = vpack.c.bf16 %v196, %v195
        %v203 = vunpack.c.l.b16 %v189
        %v204 = vunpack.c.l.b16 %v190
        %v205 = vunpack.c.l.b16 %v191
        %v206 = vunpack.c.l.b16 %v192
        %v207 = vpack.c.b16 %v204, %v203
        %v208 = vpack.c.b16 %v206, %v205
        %vm211 = vcmask 261120
        %v213 = vsel %vm211, %v197, 0
        %v216 = vsel %vm211, %v198, 0
        %218 = vmatpush.bf16.msra.mxu0 0
        %219 = vmatpush.bf16.msra.mxu0 0
        %220 = vmatpush.bf16.msra.mxu0 0
        %221 = vmatpush.bf16.msra.mxu0 0
        %222 = vmatpush.bf16.msra.mxu0 0
        %223 = vmatpush.bf16.msra.mxu0 0
        %224 = vmatpush.bf16.msra.mxu0 %v208
        %225 = vmatpush.bf16.msra.mxu0 %v207
        %226 = vmatmul.bf16.gmra.mxu0 %v213
        %v227 = vpop.f32.mrf.mxu0
        %v228 = vadd.f32 0.0, %v227
        %v229 = vpop.f32.mrf.mxu0
        %v230 = vadd.f32 0.0, %v229
        %231 = vmatmul.bf16.gmra.mxu0 %v216
        %v232 = vpop.f32.mrf.mxu0
        %v233 = vadd.f32 0.0, %v232
        %v234 = vpop.f32.mrf.mxu0
        %v235 = vadd.f32 0.0, %v234
        %236 = vdwg.mxu0
        %v237 = vld [vmem:[#allocation2] sm:$0x1]
        %v238 = vsel %vm211, %v228, 0.0
        %v239 = vsel %vm211, %v230, 0.0
        %v240 = vadd.f32 %v238, %v239
        %v241 = vsel %vm211, %v233, 0.0
        %v242 = vadd.f32 %v240, %v241
        %v243 = vsel %vm211, %v235, 0.0
        %v244 = vadd.f32 %v242, %v243
        %v245 = vrot.slane %v244, 4
        %v246 = vadd.f32 %v244, %v245
        %v247 = vrot.slane %v246, 2
        %v248 = vadd.f32 %v246, %v247
        %v249 = vrot.slane %v248, 1
        %v250 = vadd.f32 %v248, %v249
        %v251 = vadd.f32 %v237, %v250
        %vm252 = vcmask 253952
        %253 = vst.msk [vmem:[#allocation2] sm:$0x1] %vm252, %v251
        %v254 = vld [vmem:[#allocation3] sm:$0x1]
        %v255 = vmul.f32 %v228, %v228
        %v256 = vmul.f32 %v230, %v230
        %v257 = vmul.f32 %v233, %v233
        %v258 = vmul.f32 %v235, %v235
        %v259 = vsel %vm211, %v255, 0.0
        %v260 = vsel %vm211, %v256, 0.0
        %v261 = vadd.f32 %v259, %v260
        %v262 = vsel %vm211, %v257, 0.0
        %v263 = vadd.f32 %v261, %v262
        %v264 = vsel %vm211, %v258, 0.0
        %v265 = vadd.f32 %v263, %v264
        %v266 = vrot.slane %v265, 4
        %v267 = vadd.f32 %v265, %v266
        %v268 = vrot.slane %v267, 2
        %v269 = vadd.f32 %v267, %v268
        %v270 = vrot.slane %v269, 1
        %v271 = vadd.f32 %v269, %v270
        %v272 = vadd.f32 %v254, %v271
        %273 = vst.msk [vmem:[#allocation3] sm:$0x1] %vm252, %v272
        %v274 = vld [vmem:[%s179] sm:$0xff]
        %v275 = vld [vmem:[%s179 + $0x8] sm:$0xff]
        %v276 = vld [vmem:[%s179 + $0x10] sm:$0xff]
        %v277 = vld [vmem:[%s179 + $0x18] sm:$0xff]
        %v278 = vpack.c.bf16 %v275, %v274
        %v279 = vpack.c.bf16 %v277, %v276
        %v281 = vsel %vm211, %v278, 0
        %v284 = vsel %vm211, %v279, 0
        %286 = vmatpush.bf16.msra.mxu0 0
        %287 = vmatpush.bf16.msra.mxu0 0
        %288 = vmatpush.bf16.msra.mxu0 0
        %289 = vmatpush.bf16.msra.mxu0 0
        %290 = vmatpush.bf16.msra.mxu0 0
        %291 = vmatpush.bf16.msra.mxu0 0
        %292 = vmatpush.bf16.msra.mxu0 %v208
        %293 = vmatpush.bf16.msra.mxu0 %v207
        %294 = vmatmul.bf16.gmra.mxu0 %v281
        %v295 = vpop.f32.mrf.mxu0
        %v296 = vadd.f32 0.0, %v295
        %v297 = vpop.f32.mrf.mxu0
        %v298 = vadd.f32 0.0, %v297
        %299 = vmatmul.bf16.gmra.mxu0 %v284
        %v300 = vpop.f32.mrf.mxu0
        %v301 = vadd.f32 0.0, %v300
        %v302 = vpop.f32.mrf.mxu0
        %v303 = vadd.f32 0.0, %v302
        %304 = vdwg.mxu0
        %v305 = vld [vmem:[#allocation2 + $0x1] sm:$0x1]
        %v306 = vsel %vm211, %v296, 0.0
        %v307 = vsel %vm211, %v298, 0.0
        %v308 = vadd.f32 %v306, %v307
        %v309 = vsel %vm211, %v301, 0.0
        %v310 = vadd.f32 %v308, %v309
        %v311 = vsel %vm211, %v303, 0.0
        %v312 = vadd.f32 %v310, %v311
        %v313 = vrot.slane %v312, 4
        %v314 = vadd.f32 %v312, %v313
        %v315 = vrot.slane %v314, 2
        %v316 = vadd.f32 %v314, %v315
        %v317 = vrot.slane %v316, 1
        %v318 = vadd.f32 %v316, %v317
        %v319 = vadd.f32 %v305, %v318
        %320 = vst.msk [vmem:[#allocation2 + $0x1] sm:$0x1] %vm252, %v319
        %v321 = vld [vmem:[#allocation3 + $0x1] sm:$0x1]
        %v322 = vmul.f32 %v296, %v296
        %v323 = vmul.f32 %v298, %v298
        %v324 = vmul.f32 %v301, %v301
        %v325 = vmul.f32 %v303, %v303
        %v326 = vsel %vm211, %v322, 0.0
        %v327 = vsel %vm211, %v323, 0.0
        %v328 = vadd.f32 %v326, %v327
        %v329 = vsel %vm211, %v324, 0.0
        %v330 = vadd.f32 %v328, %v329
        %v331 = vsel %vm211, %v325, 0.0
        %v332 = vadd.f32 %v330, %v331
        %v333 = vrot.slane %v332, 4
        %v334 = vadd.f32 %v332, %v333
        %v335 = vrot.slane %v334, 2
        %v336 = vadd.f32 %v334, %v335
        %v337 = vrot.slane %v336, 1
        %v338 = vadd.f32 %v336, %v337
        %v339 = vadd.f32 %v321, %v338
        %340 = vst.msk [vmem:[#allocation3 + $0x1] sm:$0x1] %vm252, %v339
        %p341 = scmp.eq.s32.totalorder %s15, 3
        // Predicated region
        $region37: #{tpu_custom_call.1} parent=31 // pred_check
          %p342 = pneg %p341
        $region38: #{tpu_custom_call.1} parent=31 // pred_check_branch
          %344 = sbr.rel (%p342) target = $region40
        $region39: #{tpu_custom_call.1} parent=31 // pred_region
          %v345 = vld [vmem:[#allocation2] sm:$0x3]
          %v346 = vmul.f32 %v345, 0.0078125
          %v347 = vld [vmem:[#allocation3] sm:$0x3]
          %v348 = vmul.f32 %v347, 0.0078125
          %v349 = vmul.f32 %v346, %v346
          %v350 = vsub.f32 %v348, %v349
          %vm351 = vcmask 254976
          %352 = vst.msk [vmem:[#allocation4] sm:$0x3] %vm351, %v346
          %353 = vst.msk [vmem:[#allocation4 + $0x2] sm:$0x3] %vm351, %v350
        $region40: #{tpu_custom_call.1} parent=31 // pred_fallthru
          _
        // Predicated region
        $region41: #{tpu_custom_call.1} parent=31 // pred_check
          %p354 = pneg %p101
        $region42: #{tpu_custom_call.1} parent=31 // pred_check_branch
          %356 = sbr.rel (%p354) target = $region44
        $region43: #{tpu_custom_call.1} parent=31 // pred_region
          %358 = vsyncadd [#allocation5], 0
          %s360 = sshll.u32 [#allocation4], 4
          %s361 = int_to_ptr.vmem [resolvable:$true] %s360
          %s362 = sshll.u32 %s3, 4
          %s363 = int_to_ptr.hbm [resolvable:$true] %s362
          %365 = dma.vmem_to_hbm [thread:$0]  %s361, 64, %s363, [#allocation5]
        $region44: #{tpu_custom_call.1} parent=31 // pred_fallthru
          _
        // Predicated region
        $region45: #{tpu_custom_call.1} parent=31 // pred_check
          %p366 = pneg %p101
        $region46: #{tpu_custom_call.1} parent=31 // pred_check_branch
          %368 = sbr.rel (%p366) target = $region48
        $region47: #{tpu_custom_call.1} parent=31 // pred_region
          %370 = dma.done [#allocation5], 64
        $region48: #{tpu_custom_call.1} parent=31 // pred_fallthru
          _
      $region32: #{tpu_custom_call.1} parent=5 // pred_fallthru
        _
      %p371 = scmp.le.s32.totalorder 2, %s10
      // Predicated region
      $region49: #{tpu_custom_call.1} parent=5 // pred_check
        %p372 = pneg %p371
      $region50: #{tpu_custom_call.1} parent=5 // pred_check_branch
        %374 = sbr.rel (%p372) target = $region52
      $region51: #{tpu_custom_call.1} parent=5 // pred_region
        %s375 = ssub.s32 %s10, 2
      $region52: #{tpu_custom_call.1} parent=5 // pred_fallthru
        _
    $region6: #{tpu_custom_call.1} parent=1 // loop_footer
      %s14 = sadd.s32 1, %s10
    $region7: #{tpu_custom_call.1} parent=1 // loop_footer_branch
      %9 = sbr.rel target = $region3
    $region8: #{tpu_custom_call.1} parent=1 // loop_exit
      _
    %376 = vsyncpa [#allocation5], 1
    %s377 = scalar_lea.sflag [#allocation5], 1
    %378 = vsyncpa %s377, 1

</llo_original>
